<compile_context>
chip_gen: v7x
topology: tpu7x:2x2x1
jax: 0.10.0
libtpu: 0.0.40
codegen_flags: <defaults>
</compile_context>

<pallas_src>
import functools

import jax
import jax.numpy as jnp
import numpy as np
from jax.experimental import pallas as pl
from jax.experimental.pallas import tpu as pltpu


def _round_up(x: int, m: int) -> int:
    return ((x + m - 1) // m) * m


def _spec_kernel(f_pad: int, power: float, basis_ref, frames_ref, out_ref):
    # basis_ref : (2*f_pad, n_fft) bf16 — rows [0:F)        = window*cos,
    #                                      rows [f_pad:f_pad+F) = window*(-sin)
    # frames_ref: (n_fft, c_tile)  bf16 — one lane tile of frame columns
    # out_ref   : (f_pad, c_tile)  f32  — |X|^power
    z = jnp.dot(basis_ref[...], frames_ref[...],
                preferred_element_type=jnp.float32)      # (2*f_pad, c_tile)
    re = z[:f_pad, :]
    im = z[f_pad:, :]
    mag2 = re * re + im * im
    if power == 2.0:
        out_ref[...] = mag2
    elif power == 1.0:
        out_ref[...] = jnp.sqrt(mag2)
    else:
        out_ref[...] = jnp.power(mag2, 0.5 * power)


def _hann_window(win_length: int) -> jnp.ndarray:
    # torch.hann_window default is the *periodic* Hann window.
    n = jnp.arange(win_length, dtype=jnp.float32)
    return 0.5 - 0.5 * jnp.cos(2.0 * jnp.pi * n / win_length)


def _windowed_dft_basis(n_fft: int, f_pad: int, window_full: jnp.ndarray,
                        scale: float) -> jnp.ndarray:
    # onesided rfft basis with the analysis window (length n_fft) folded in:
    #   X[k] = sum_n x[n] * (scale * w[n] * exp(-2*pi*i*k*n/N))
    n_freq = n_fft // 2 + 1
    k = jnp.arange(n_freq, dtype=jnp.float32)[:, None]
    n = jnp.arange(n_fft, dtype=jnp.float32)[None, :]
    ang = 2.0 * jnp.pi * k * n / n_fft
    w = (window_full * scale)[None, :]
    cos_w = jnp.cos(ang) * w
    nsin_w = -jnp.sin(ang) * w
    basis = jnp.zeros((2 * f_pad, n_fft), jnp.float32)
    basis = basis.at[:n_freq, :].set(cos_w)
    basis = basis.at[f_pad:f_pad + n_freq, :].set(nsin_w)
    return basis.astype(jnp.bfloat16)


@functools.partial(
    jax.jit,
    static_argnames=("n_fft", "hop_length", "win_length", "pad", "power",
                     "normalized", "lane_tile"))
def spectrogram_pallas(waveform: jnp.ndarray,
                       n_fft: int,
                       hop_length: int,
                       win_length: int,
                       pad: int = 0,
                       power: float = 2.0,
                       normalized: bool = False,
                       lane_tile: int = 1024) -> jnp.ndarray:
    """|STFT|^power of `waveform` with shape (..., time).

    Returns shape (..., n_fft//2+1, n_frames), float32.
    """
    assert win_length <= n_fft, "torch.stft requires win_length <= n_fft"
    shape = waveform.shape
    x = waveform.reshape(-1, shape[-1]).astype(jnp.float32)          # (R, L)
    if pad > 0:
        x = jnp.pad(x, ((0, 0), (pad, pad)))                         # constant pad
    R, L = x.shape

    # center=True, pad_mode="reflect": pad n_fft//2 on both sides (glue).
    half = n_fft // 2
    assert L > half, "reflect padding requires time > n_fft // 2 (same as torch)"
    xp = jnp.pad(x, ((0, 0), (half, half)), mode="reflect")          # (R, L + n_fft)
    padded_len = L + 2 * half
    n_frames = 1 + (padded_len - n_fft) // hop_length
    n_freq = n_fft // 2 + 1
    f_pad = _round_up(n_freq, 8)

    # window centered inside the n_fft frame (torch.stft behaviour).
    win = _hann_window(win_length)
    left = (n_fft - win_length) // 2
    window_full = jnp.zeros((n_fft,), jnp.float32).at[left:left + win_length].set(win)
    scale = 1.0
    if normalized:
        scale = 1.0 / jnp.sqrt(jnp.sum(window_full * window_full))

    # ---- framing: lane-major (n_fft, R*T) frame matrix in bf16 ----
    if 2 * hop_length == n_fft and padded_len % hop_length == 0:
        # 50% overlap: frame t = [chunk_t ; chunk_{t+1}] of non-overlapping
        # half-chunks — no gather; bf16 frames cost the same bytes as f32 input.
        n_chunks = padded_len // hop_length
        ch = jnp.transpose(xp.reshape(R, n_chunks, hop_length), (2, 0, 1))
        ch = ch.astype(jnp.bfloat16)                                  # (hop, R, n_chunks)
        frames = jnp.concatenate([ch[:, :, :-1], ch[:, :, 1:]], axis=0)  # (n_fft, R, T)
    else:
        # TODO(synk): general hop could avoid this gather with a manual
        # overlapping DMA (memory_space=pl.ANY) per lane tile.
        idx = jnp.arange(n_frames)[:, None] * hop_length + jnp.arange(n_fft)[None, :]
        frames = jnp.transpose(xp[:, idx], (2, 0, 1)).astype(jnp.bfloat16)
    C = R * n_frames
    frames = frames.reshape(n_fft, C)

    # Lane tiling: multiples of 128, capped at `lane_tile`.
    c_tile = min(_round_up(lane_tile, 128), _round_up(C, 128))
    c_pad = _round_up(C, c_tile)
    if c_pad != C:
        frames = jnp.pad(frames, ((0, 0), (0, c_pad - C)))

    basis = _windowed_dft_basis(n_fft, f_pad, window_full, scale)     # (2*f_pad, n_fft)

    flops = 2 * (2 * f_pad) * n_fft * c_pad + 3 * f_pad * c_pad
    bytes_accessed = (basis.size * 2) + (n_fft * c_pad * 2) + (f_pad * c_pad * 4)

    out = pl.pallas_call(
        functools.partial(_spec_kernel, f_pad, float(power)),
        out_shape=jax.ShapeDtypeStruct((f_pad, c_pad), jnp.float32),
        grid_spec=pltpu.PrefetchScalarGridSpec(
            num_scalar_prefetch=0,
            grid=(c_pad // c_tile,),
            in_specs=[
                pl.BlockSpec((2 * f_pad, n_fft), lambda c: (0, 0)),   # stacked basis (resident)
                pl.BlockSpec((n_fft, c_tile), lambda c: (0, c)),      # frame columns
            ],
            out_specs=pl.BlockSpec((f_pad, c_tile), lambda c: (0, c)),
        ),
        compiler_params=pltpu.CompilerParams(
            dimension_semantics=("parallel",),
            vmem_limit_bytes=32 * 1024 * 1024,
        ),
        cost_estimate=pl.CostEstimate(flops=flops, transcendentals=0,
                                      bytes_accessed=bytes_accessed),
    )(basis, frames)

    # Cheap un-fold on the small output: (F_pad, R*T) -> (..., F, T).
    out = out[:n_freq, :C].reshape(n_freq, R, n_frames)
    out = jnp.transpose(out, (1, 0, 2))                               # (R, F, T)
    return out.reshape(shape[:-1] + (n_freq, n_frames))


if __name__ == "__main__":
    # Small, module-consistent synthetic config.
    n_fft = 64
    win_length = n_fft
    hop_length = win_length // 2

    key = jax.random.PRNGKey(0)
    x = jax.random.normal(key, (2, 4, 128), dtype=jnp.float32)        # (..., time)

    spec = spectrogram_pallas(x, n_fft=n_fft, hop_length=hop_length,
                              win_length=win_length)
    spec = jax.block_until_ready(spec)

    # float64 rfft reference (same framing / periodic Hann / power=2).
    n_freq = n_fft // 2 + 1
    half = n_fft // 2
    xnp = np.asarray(x, dtype=np.float64).reshape(-1, x.shape[-1])
    xpad = np.pad(xnp, ((0, 0), (half, half)), mode="reflect")
    n_frames = 1 + (xpad.shape[-1] - n_fft) // hop_length
    idx = np.arange(n_frames)[:, None] * hop_length + np.arange(n_fft)[None, :]
    frames_tn = xpad[:, idx]                                          # (R, T, N)
    win = 0.5 - 0.5 * np.cos(2.0 * np.pi * np.arange(n_fft) / n_fft)
    ref = np.abs(np.fft.rfft(frames_tn * win, axis=-1)) ** 2          # (R, T, F)
    ref = np.transpose(ref, (0, 2, 1)).reshape(x.shape[:-1] + (n_freq, n_frames))

    assert spec.shape == (2, 4, n_freq, n_frames), spec.shape
    spec_np = np.asarray(spec, dtype=np.float64)

    # End-to-end accuracy vs float64 reference (bf16 MXU inputs, f32 accumulate).
    rel_fro = np.linalg.norm(spec_np - ref) / np.linalg.norm(ref)
    assert rel_fro < 2e-2, f"relative Frobenius error too large: {rel_fro}"
    np.testing.assert_allclose(spec_np, ref, rtol=5e-2, atol=1e-1)

    print("KERNEL_OK")
</pallas_src>

<mosaic_0001>
module attributes {stable_mosaic.version = 11 : i64} {
  func.func @_spec_kernel(%arg0: i32, %arg1: memref<80x64xbf16, #tpu.memory_space<vmem>>, %arg2: memref<64x128xbf16, #tpu.memory_space<vmem>>, %arg3: memref<40x128xf32, #tpu.memory_space<vmem>>) attributes {dimension_semantics = [#tpu.dimension_semantics<parallel>], iteration_bounds = array<i64: 1>, scalar_prefetch = 0 : i64, scratch_operands = 0 : i64, tpu.core_type = #tpu.core_type<tc>, window_params = [{pipeline_mode = #tpu.pipeline_mode<synchronous>, transform_indices = @transform_0, window_bounds = array<i64: 80, 64>}, {transform_indices = @transform_1, window_bounds = array<i64: 64, 128>}, {transform_indices = @transform_2, window_bounds = array<i64: 40, 128>}]} {
    %c0 = arith.constant 0 : index
    %c0_0 = arith.constant 0 : index
    %0 = vector.load %arg1[%c0, %c0_0] : memref<80x64xbf16, #tpu.memory_space<vmem>>, vector<80x64xbf16>
    %c0_1 = arith.constant 0 : index
    %c0_2 = arith.constant 0 : index
    %1 = vector.load %arg2[%c0_1, %c0_2] : memref<64x128xbf16, #tpu.memory_space<vmem>>, vector<64x128xbf16>
    %cst = arith.constant dense<0.000000e+00> : vector<80x128xf32>
    %2 = tpu.matmul %0, %1, %cst {dimension_numbers = #tpu.dot_dimension_numbers<[1], [0], [0], [1], [0, 0, 1, 1], [], []>} : vector<80x64xbf16>, vector<64x128xbf16>, vector<80x128xf32> -> vector<80x128xf32>
    %3 = vector.extract_strided_slice %2 {offsets = [0, 0], sizes = [40, 128], strides = [1, 1]} : vector<80x128xf32> to vector<40x128xf32>
    %4 = vector.extract_strided_slice %2 {offsets = [40, 0], sizes = [40, 128], strides = [1, 1]} : vector<80x128xf32> to vector<40x128xf32>
    %5 = arith.mulf %3, %3 : vector<40x128xf32>
    %6 = arith.mulf %4, %4 : vector<40x128xf32>
    %7 = arith.addf %5, %6 : vector<40x128xf32>
    %c0_3 = arith.constant 0 : index
    %c0_4 = arith.constant 0 : index
    %8 = vector.load %arg3[%c0_3, %c0_4] : memref<40x128xf32, #tpu.memory_space<vmem>>, vector<40x128xf32>
    tpu.vector_store %arg3[%c0_3, %c0_4], %7 {strides = array<i32>} : memref<40x128xf32, #tpu.memory_space<vmem>>, vector<40x128xf32>,
    return
  }
  func.func @transform_0(%arg0: i32) -> (i32, i32) {
    %c0_i32 = arith.constant 0 : i32
    %c0_i32_0 = arith.constant 0 : i32
    %c0_i32_1 = arith.constant 0 : i32
    return %c0_i32, %c0_i32_0 : i32, i32
  }
  func.func @transform_1(%arg0: i32) -> (i32, i32) {
    %c0_i32 = arith.constant 0 : i32
    %c0_i32_0 = arith.constant 0 : i32
    return %c0_i32, %arg0 : i32, i32
  }
  func.func @transform_2(%arg0: i32) -> (i32, i32) {
    %c0_i32 = arith.constant 0 : i32
    %c0_i32_0 = arith.constant 0 : i32
    return %c0_i32, %arg0 : i32, i32
  }
}

</mosaic_0001>

<llo_original>
// kernel: spectrogram_pallas.1
$region0: #{spectrogram_pallas.1}
  #allocation0 [shape = 'u32[]', space=smem, size = 0x4, offset = 0x4, fixed_abs, tag = 'smem constant byte address 0x4 - core index']
  #allocation1 [shape = 'u32[144,128]{1,0:T(1,128)}', space=vmem, size = 0x12000, scoped, tag = 'internal scratch']
  %s0 = inlined_call_operand.vmem [shape: bf16[80,64], index: 0, kind: input, shape index: {}]
  %s1 = inlined_call_operand.vmem [shape: bf16[64,128], index: 1, kind: input, shape index: {}]
  %s2 = inlined_call_operand.vmem [shape: f32[40,128], index: 2, kind: output, shape index: {}]
  %s3 = sld [smem:[#allocation0]]
  $region18: #{spectrogram_pallas.1} parent=0
    _
  %s5 = ssub.s32 1, %s3
  %s6 = scalar_select 0, %s5, %s3
  // Predicated region
  $region2: #{spectrogram_pallas.1} parent=0 // pred_check
    _
  $region3: #{spectrogram_pallas.1} parent=0 // pred_check_branch
    %8 = sbr.rel (0) target = $region5
  $region4: #{spectrogram_pallas.1} parent=0 // pred_region
    _
  $region5: #{spectrogram_pallas.1} parent=0 // pred_fallthru
    _
  // Predicated region
  $region6: #{spectrogram_pallas.1} parent=0 // pred_check
    _
  $region7: #{spectrogram_pallas.1} parent=0 // pred_check_branch
    %10 = sbr.rel (0) target = $region9
  $region8: #{spectrogram_pallas.1} parent=0 // pred_region
    _
  $region9: #{spectrogram_pallas.1} parent=0 // pred_fallthru
    _
  %v12 = vld [vmem:[%s0] sm:$0xf]
  %v13 = vld [vmem:[%s0 + $0x4] sm:$0xf]
  %v14 = vld [vmem:[%s0 + $0x8] sm:$0xf]
  %v15 = vld [vmem:[%s0 + $0xc] sm:$0xf]
  %v16 = vld [vmem:[%s0 + $0x10] sm:$0xf]
  %v17 = vld [vmem:[%s0 + $0x14] sm:$0xf]
  %v18 = vld [vmem:[%s0 + $0x18] sm:$0xf]
  %v19 = vld [vmem:[%s0 + $0x1c] sm:$0xf]
  %v20 = vld [vmem:[%s0 + $0x20] sm:$0xf]
  %v21 = vld [vmem:[%s0 + $0x24] sm:$0xf]
  %v22 = vld [vmem:[%s1] sm:$0xf]
  %v23 = vld [vmem:[%s1 + $0x4] sm:$0xf]
  %v24 = vld [vmem:[%s1 + $0x8] sm:$0xf]
  %v25 = vld [vmem:[%s1 + $0xc] sm:$0xf]
  %v26 = vld [vmem:[%s1 + $0x10] sm:$0xf]
  %v27 = vld [vmem:[%s1 + $0x14] sm:$0xf]
  %v28 = vld [vmem:[%s1 + $0x18] sm:$0xf]
  %v29 = vld [vmem:[%s1 + $0x1c] sm:$0xf]
  %v40 = vunpack.c.l.b16 %v12
  %v41 = vunpack.c.l.b16 %v13
  %v42 = vunpack.c.l.b16 %v14
  %v43 = vunpack.c.l.b16 %v15
  %v44 = vunpack.c.l.b16 %v16
  %v45 = vunpack.c.l.b16 %v17
  %v46 = vunpack.c.l.b16 %v18
  %v47 = vunpack.c.l.b16 %v19
  %v48 = vunpack.c.l.b16 %v20
  %v49 = vunpack.c.l.b16 %v21
  %v50 = vpack.c.b16 %v41, %v40
  %v51 = vpack.c.b16 %v43, %v42
  %v52 = vpack.c.b16 %v45, %v44
  %v53 = vpack.c.b16 %v47, %v46
  %v54 = vpack.c.b16 %v49, %v48
  %v63 = vunpack.c.l.b16 %v22
  %v64 = vunpack.c.l.b16 %v23
  %v65 = vunpack.c.l.b16 %v24
  %v66 = vunpack.c.l.b16 %v25
  %v67 = vunpack.c.l.b16 %v26
  %v68 = vunpack.c.l.b16 %v27
  %v69 = vunpack.c.l.b16 %v28
  %v70 = vunpack.c.l.b16 %v29
  %v71 = vpack.c.b16 %v64, %v63
  %v72 = vpack.c.b16 %v66, %v65
  %v73 = vpack.c.b16 %v68, %v67
  %v74 = vpack.c.b16 %v70, %v69
  %vm79 = vcmask 523264
  %v81 = vsel %vm79, %v50, 0
  %v84 = vsel %vm79, %v51, 0
  %v87 = vsel %vm79, %v52, 0
  %v90 = vsel %vm79, %v53, 0
  %v93 = vsel %vm79, %v54, 0
  %95 = vmatprep.subr.bf16.mxu0 0
  %96 = vmatpush1.bf16.msra.mxu0 %v71
  %97 = vmatprep.subr.bf16.mxu0 0
  %98 = vmatpush1.bf16.msra.mxu0 %v72
  %99 = vmatprep.subr.bf16.mxu0 0
  %100 = vmatpush1.bf16.msra.mxu0 %v73
  %101 = vmatprep.subr.bf16.mxu0 0
  %102 = vmatpush1.bf16.msra.mxu0 %v74
  %103 = vmatprep.subr.bf16.mxu0 0
  %104 = vmatpush1.bf16.msra.mxu0 0
  %105 = vmatprep.subr.bf16.mxu0 0
  %106 = vmatpush1.bf16.msra.mxu0 0
  %107 = vmatprep.subr.bf16.mxu0 0
  %108 = vmatpush1.bf16.msra.mxu0 0
  %109 = vmatprep.subr.bf16.mxu0 0
  %110 = vmatpush1.bf16.msra.mxu0 0
  %111 = vmatprep.subr.bf16.mxu0 0
  %112 = vmatpush1.bf16.msra.mxu0 0
  %113 = vmatprep.subr.bf16.mxu0 0
  %114 = vmatpush1.bf16.msra.mxu0 0
  %115 = vmatprep.subr.bf16.mxu0 0
  %116 = vmatpush1.bf16.msra.mxu0 0
  %117 = vmatprep.subr.bf16.mxu0 0
  %118 = vmatpush1.bf16.msra.mxu0 0
  %119 = vmatprep.subr.bf16.mxu0 0
  %120 = vmatpush1.bf16.msra.mxu0 0
  %121 = vmatprep.subr.bf16.mxu0 0
  %122 = vmatpush1.bf16.msra.mxu0 0
  %123 = vmatprep.subr.bf16.mxu0 0
  %124 = vmatpush1.bf16.msra.mxu0 0
  %125 = vmatprep.subr.bf16.mxu0 0
  %126 = vmatpush1.bf16.msra.mxu0 0
  %127 = vmatprep.mubr.bf16.mxu0 0
  %128 = vmatmul.mubr.bf16.gmra.mrb[0].mxu0 %v81
  %v129 = vpop.f32.mrb[0].mxu0
  %v130 = vadd.f32 0.0, %v129
  %v131 = vpop.f32.mrb[0].mxu0
  %v132 = vpop.f32.mrb[0].mxu0
  %v133 = vadd.f32 0.0, %v132
  %v134 = vpop.f32.mrb[0].mxu0
  %135 = vmatprep.mubr.bf16.mxu0 0
  %136 = vmatmul.mubr.bf16.gmra.mrb[0].mxu0 %v84
  %v137 = vpop.f32.mrb[0].mxu0
  %v138 = vadd.f32 0.0, %v137
  %v139 = vpop.f32.mrb[0].mxu0
  %v140 = vpop.f32.mrb[0].mxu0
  %v141 = vadd.f32 0.0, %v140
  %v142 = vpop.f32.mrb[0].mxu0
  %143 = vmatprep.mubr.bf16.mxu0 0
  %144 = vmatmul.mubr.bf16.gmra.mrb[0].mxu0 %v87
  %v145 = vpop.f32.mrb[0].mxu0
  %v146 = vadd.f32 0.0, %v145
  %v147 = vpop.f32.mrb[0].mxu0
  %v148 = vpop.f32.mrb[0].mxu0
  %v149 = vadd.f32 0.0, %v148
  %v150 = vpop.f32.mrb[0].mxu0
  %151 = vmatprep.mubr.bf16.mxu0 0
  %152 = vmatmul.mubr.bf16.gmra.mrb[0].mxu0 %v90
  %v153 = vpop.f32.mrb[0].mxu0
  %v154 = vadd.f32 0.0, %v153
  %v155 = vpop.f32.mrb[0].mxu0
  %v156 = vpop.f32.mrb[0].mxu0
  %v157 = vadd.f32 0.0, %v156
  %v158 = vpop.f32.mrb[0].mxu0
  %159 = vmatprep.mubr.bf16.mxu0 0
  %160 = vmatmul.mubr.bf16.gmra.mrb[0].mxu0 %v93
  %v161 = vpop.f32.mrb[0].mxu0
  %v162 = vadd.f32 0.0, %v161
  %v163 = vpop.f32.mrb[0].mxu0
  %v164 = vpop.f32.mrb[0].mxu0
  %v165 = vadd.f32 0.0, %v164
  %v166 = vpop.f32.mrb[0].mxu0
  %167 = vdwg.mxu0
  %v168 = vmul.f32 %v130, %v130
  %v169 = vmul.f32 %v133, %v133
  %v170 = vmul.f32 %v138, %v138
  %v171 = vmul.f32 %v141, %v141
  %v172 = vmul.f32 %v146, %v146
  %v173 = vmul.f32 %v149, %v149
  %v174 = vmul.f32 %v154, %v154
  %v175 = vmul.f32 %v157, %v157
  %v176 = vmul.f32 %v162, %v162
  %v177 = vmul.f32 %v165, %v165
  %v178 = vadd.f32 %v168, %v173
  %v179 = vadd.f32 %v169, %v174
  %v180 = vadd.f32 %v170, %v175
  %v181 = vadd.f32 %v171, %v176
  %v182 = vadd.f32 %v172, %v177
  %183 = vst [vmem:[%s2] sm:$0xff] %v178
  %184 = vst [vmem:[%s2 + $0x8] sm:$0xff] %v179
  %185 = vst [vmem:[%s2 + $0x10] sm:$0xff] %v180
  %186 = vst [vmem:[%s2 + $0x18] sm:$0xff] %v181
  %187 = vst [vmem:[%s2 + $0x20] sm:$0xff] %v182
  // Predicated region
  $region10: #{spectrogram_pallas.1} parent=0 // pred_check
    _
  $region11: #{spectrogram_pallas.1} parent=0 // pred_check_branch
    %189 = sbr.rel (0) target = $region13
  $region12: #{spectrogram_pallas.1} parent=0 // pred_region
    _
  $region13: #{spectrogram_pallas.1} parent=0 // pred_fallthru
    _
  // Predicated region
  $region14: #{spectrogram_pallas.1} parent=0 // pred_check
    _
  $region15: #{spectrogram_pallas.1} parent=0 // pred_check_branch
    %191 = sbr.rel (0) target = $region17
  $region16: #{spectrogram_pallas.1} parent=0 // pred_region
    _
  $region17: #{spectrogram_pallas.1} parent=0 // pred_fallthru
    _

</llo_original>
